<compile_context>
chip_gen: v5e
topology: v5e:2x2
jax: 0.10.0
libtpu: 0.0.40
codegen_flags: <defaults>
</compile_context>

<pallas_src>
import functools

import jax
import jax.numpy as jnp
from jax.experimental import pallas as pl
from jax.experimental.pallas import tpu as pltpu

_LANES = 128
_MAX_BLOCK_ROWS = 4096  # (4096,128) f32 = 2 MiB per input block; 2 inputs x 2 bufs = 8 MiB VMEM
# Minimum sublane multiple per element size (f32 -> 8, bf16 -> 16, int8/fp8 -> 32).
_SUBLANE_MULT = {4: 8, 2: 16, 1: 32}


def _partial_sqdiff_kernel(a_ref, b_ref, o_ref, *, block_rows, valid_last_rows, n_blocks):
    """One grid step: write the (8, 128) sublane-partial sums of (a-b)^2 for this block."""
    d = a_ref[...].astype(jnp.float32) - b_ref[...].astype(jnp.float32)
    dd = d * d

    def _reduce(x):
        # (block_rows, 128) -> (8, 128): sum groups of 8 sublanes (pure VPU vreg adds,
        # layout-preserving reshape).
        return jnp.sum(x.reshape(block_rows // 8, 8, _LANES), axis=0)

    if valid_last_rows < block_rows:
        # Last block is ragged: mask rows past the end of the (un-padded) array.
        i = pl.program_id(0)

        if n_blocks > 1:
            @pl.when(i < n_blocks - 1)
            def _():
                o_ref[...] = _reduce(dd)

        @pl.when(i == n_blocks - 1)
        def _():
            row_ids = jax.lax.broadcasted_iota(jnp.int32, (block_rows, _LANES), 0)
            o_ref[...] = _reduce(jnp.where(row_ids < valid_last_rows, dd, 0.0))
    else:
        o_ref[...] = _reduce(dd)


def _sum_sqdiff_pallas(a2, b2, rows, block_rows, n_blocks):
    """sum((a2 - b2)^2) over a (rows, 128) pair via per-block partial sums."""
    kernel = functools.partial(
        _partial_sqdiff_kernel,
        block_rows=block_rows,
        valid_last_rows=rows - (n_blocks - 1) * block_rows,
        n_blocks=n_blocks,
    )
    partials = pl.pallas_call(
        kernel,
        out_shape=jax.ShapeDtypeStruct((n_blocks * 8, _LANES), jnp.float32),
        grid_spec=pltpu.PrefetchScalarGridSpec(
            num_scalar_prefetch=0,
            grid=(n_blocks,),
            in_specs=[
                pl.BlockSpec((block_rows, _LANES), lambda i: (i, 0)),
                pl.BlockSpec((block_rows, _LANES), lambda i: (i, 0)),
            ],
            out_specs=pl.BlockSpec((8, _LANES), lambda i: (i, 0)),
        ),
        compiler_params=pltpu.CompilerParams(
            dimension_semantics=("parallel",),  # independent blocks -> dual-TC on v7x
        ),
    )(a2, b2)
    # Tiny final reduction in plain JAX.
    return jnp.sum(partials)


def _mse_pallas(a: jax.Array, b: jax.Array) -> jax.Array:
    """Mean squared error between a and b (matching shapes), f32 scalar."""
    assert a.shape == b.shape, (a.shape, b.shape)
    n = a.size
    sub_mult = _SUBLANE_MULT.get(jnp.dtype(a.dtype).itemsize, 8)
    min_elems = sub_mult * _LANES

    if n < min_elems:
        # Smaller than one tile (e.g. the (2,32) latent): plain JAX is strictly faster.
        return jnp.mean((a.astype(jnp.float32) - b.astype(jnp.float32)) ** 2)

    a_flat = a.reshape(-1)
    b_flat = b.reshape(-1)

    rem = n % _LANES
    if rem:
        # TODO(synk): lane-ragged sizes need a <128-element zero pad, which costs one HBM
        # copy of each operand; the common n % 128 == 0 case takes the copy-free path.
        pad = _LANES - rem
        a_flat = jnp.pad(a_flat, (0, pad))
        b_flat = jnp.pad(b_flat, (0, pad))

    rows = a_flat.size // _LANES  # >= sub_mult, since n >= sub_mult * 128
    block_rows = max(sub_mult, (min(_MAX_BLOCK_ROWS, rows) // sub_mult) * sub_mult)
    n_blocks = pl.cdiv(rows, block_rows)

    a2 = a_flat.reshape(rows, _LANES)
    b2 = b_flat.reshape(rows, _LANES)

    total = _sum_sqdiff_pallas(a2, b2, rows, block_rows, n_blocks)
    return total / jnp.float32(n)


def stable_loss(xpred, target, *, alpha: float = 0.0) -> jax.Array:
    """JAX/Pallas equivalent of StableLoss.forward with MSE loss functions.

    xpred: either an array (plain MSE against target) or a tuple
           (pred, latent, latent_target).  latent_target is treated as a
           constant (the .detach() in the reference only affects gradients).
    """
    if isinstance(xpred, tuple):
        pred, latent, latent_target = xpred[0], xpred[1], xpred[2]
        loss = _mse_pallas(pred, target)
        if isinstance(alpha, (int, float)) and float(alpha) == 0.0:
            # Static alpha == 0 (module default): skip the latent pass entirely.
            return loss
        latent_target = jax.lax.stop_gradient(latent_target)  # .detach()
        return loss + _mse_pallas(latent, latent_target) * jnp.float32(alpha)
    return _mse_pallas(xpred, target)


if __name__ == "__main__":
    key = jax.random.PRNGKey(0)
    k1, k2, k3, k4, k5, k6 = jax.random.split(key, 6)

    # Small shapes consistent with the module: NCHW prediction + flat latent.
    B, C, H, W = 2, 4, 16, 16
    latent_dim = 32

    pred = jax.random.normal(k1, (B, C, H, W), dtype=jnp.float32)
    target = jax.random.normal(k2, (B, C, H, W), dtype=jnp.float32)
    latent = jax.random.normal(k3, (B, latent_dim), dtype=jnp.float32)
    latent_target = jax.random.normal(k4, (B, latent_dim), dtype=jnp.float32)

    alpha = 0.5  # exercise the latent branch (module default is 0.0)

    loss = jax.block_until_ready(
        stable_loss((pred, latent, latent_target), target, alpha=alpha)
    )
    ref = (
        jnp.mean((latent - latent_target) ** 2) * alpha
        + jnp.mean((pred - target) ** 2)
    )
    assert jnp.allclose(loss, ref, rtol=1e-5, atol=1e-5), (loss, ref)

    # Non-tuple path (single MSE through the Pallas kernel).
    loss2 = jax.block_until_ready(stable_loss(pred, target))
    ref2 = jnp.mean((pred - target) ** 2)
    assert jnp.allclose(loss2, ref2, rtol=1e-5, atol=1e-5), (loss2, ref2)

    # Multi-block path with a ragged last block (57600 elems = 450 rows of 128, no pad).
    a3 = jax.random.normal(k5, (2, 3, 96, 100), dtype=jnp.float32)
    b3 = jax.random.normal(k6, (2, 3, 96, 100), dtype=jnp.float32)
    loss3 = jax.block_until_ready(stable_loss(a3, b3))
    ref3 = jnp.mean((a3 - b3) ** 2)
    assert jnp.allclose(loss3, ref3, rtol=1e-5, atol=1e-5), (loss3, ref3)

    # Lane-ragged path (1155 elems -> small zero pad + masked last block).
    a4 = a3.reshape(-1)[:1155].reshape(3, 5, 7, 11)
    b4 = b3.reshape(-1)[:1155].reshape(3, 5, 7, 11)
    loss4 = jax.block_until_ready(stable_loss(a4, b4))
    ref4 = jnp.mean((a4 - b4) ** 2)
    assert jnp.allclose(loss4, ref4, rtol=1e-5, atol=1e-5), (loss4, ref4)

    print("KERNEL_OK")
</pallas_src>

<mosaic_0001>
module attributes {stable_mosaic.version = 11 : i64} {
  func.func @_partial_sqdiff_kernel(%arg0: i32, %arg1: memref<16x128xf32, #tpu.memory_space<vmem>>, %arg2: memref<16x128xf32, #tpu.memory_space<vmem>>, %arg3: memref<8x128xf32, #tpu.memory_space<vmem>>) attributes {dimension_semantics = [#tpu.dimension_semantics<parallel>], iteration_bounds = array<i64: 1>, scalar_prefetch = 0 : i64, scratch_operands = 0 : i64, tpu.core_type = #tpu.core_type<tc>, window_params = [{transform_indices = @transform_0, window_bounds = array<i64: 16, 128>}, {transform_indices = @transform_1, window_bounds = array<i64: 16, 128>}, {transform_indices = @transform_2, window_bounds = array<i64: 8, 128>}]} {
    %c0 = arith.constant 0 : index
    %c0_0 = arith.constant 0 : index
    %0 = vector.load %arg1[%c0, %c0_0] : memref<16x128xf32, #tpu.memory_space<vmem>>, vector<16x128xf32>
    %c0_1 = arith.constant 0 : index
    %c0_2 = arith.constant 0 : index
    %1 = vector.load %arg2[%c0_1, %c0_2] : memref<16x128xf32, #tpu.memory_space<vmem>>, vector<16x128xf32>
    %2 = arith.subf %0, %1 : vector<16x128xf32>
    %3 = arith.mulf %2, %2 : vector<16x128xf32>
    %4 = vector.shape_cast %3 : vector<16x128xf32> to vector<2x8x128xf32>
    %cst = arith.constant dense<0.000000e+00> : vector<8x128xf32>
    %5 = vector.multi_reduction <add>, %4, %cst [0] : vector<2x8x128xf32> to vector<8x128xf32>
    %c0_3 = arith.constant 0 : index
    %c0_4 = arith.constant 0 : index
    %6 = vector.load %arg3[%c0_3, %c0_4] : memref<8x128xf32, #tpu.memory_space<vmem>>, vector<8x128xf32>
    tpu.vector_store %arg3[%c0_3, %c0_4], %5 {strides = array<i32>} : memref<8x128xf32, #tpu.memory_space<vmem>>, vector<8x128xf32>,
    return
  }
  func.func @transform_0(%arg0: i32) -> (i32, i32) {
    %c0_i32 = arith.constant 0 : i32
    %c0_i32_0 = arith.constant 0 : i32
    return %arg0, %c0_i32 : i32, i32
  }
  func.func @transform_1(%arg0: i32) -> (i32, i32) {
    %c0_i32 = arith.constant 0 : i32
    %c0_i32_0 = arith.constant 0 : i32
    return %arg0, %c0_i32 : i32, i32
  }
  func.func @transform_2(%arg0: i32) -> (i32, i32) {
    %c0_i32 = arith.constant 0 : i32
    %c0_i32_0 = arith.constant 0 : i32
    return %arg0, %c0_i32 : i32, i32
  }
}

</mosaic_0001>

<llo_original>
// kernel: tpu_custom_call.1
$region0: #{tpu_custom_call.1}
  #allocation0 [shape = 'u32[]', space=smem, size = 0x4, offset = 0x4, fixed_abs, tag = 'smem constant byte address 0x4 - core index']
  #allocation1 [shape = 'u32[72,128]{1,0:T(1,128)}', space=vmem, size = 0x9000, scoped, tag = 'internal scratch']
  %s0 = inlined_call_operand.hbm [shape: f32[16,128], index: 0, kind: input, shape index: {}]
  %s1 = inlined_call_operand.hbm [shape: f32[16,128], index: 1, kind: input, shape index: {}]
  %s2 = inlined_call_operand.hbm [shape: f32[8,128], index: 2, kind: output, shape index: {}]
  %s3 = sld [smem:[#allocation0]]
  $region26: #{tpu_custom_call.1} parent=0
    _
  %s5 = ssub.s32 1, %s3
  %s6 = scalar_select 0, %s5, %s3
  $region1: #{tpu_custom_call.1} parent=0
    #allocation2 [shape = 'u8[8192]{0}', space=vmem, size = 0x2000, scoped, tag = 'input window, operand 0, single buffered']
    #allocation3 [shape = 's32[1]{0}', space=sflag, size = 0x4, scoped, tag = 'scoped memory for tpu_custom_call.1']
    #allocation4 [shape = 's32[1]{0}', space=sflag, size = 0x4, scoped, tag = 'scoped memory for tpu_custom_call.1']
    #allocation5 [shape = 'u8[8192]{0}', space=vmem, size = 0x2000, scoped, tag = 'input window, operand 1, single buffered']
    #allocation6 [shape = 's32[1]{0}', space=sflag, size = 0x4, scoped, tag = 'scoped memory for tpu_custom_call.1']
    #allocation7 [shape = 'u8[4096]{0}', space=vmem, size = 0x1000, scoped, tag = 'output window, operand 0, single buffered']
    %7 = vsyncpa [#allocation3], 0
    %8 = vsyncpa [#allocation6], 0
    %9 = vsyncpa [#allocation4], 0
    // Predicated region
    $region2: #{tpu_custom_call.1} parent=1 // pred_check
      _
    $region3: #{tpu_custom_call.1} parent=1 // pred_check_branch
      %11 = sbr.rel (0) target = $region5
    $region4: #{tpu_custom_call.1} parent=1 // pred_region
      %13 = vsyncadd [#allocation3], 0
      %s14 = sshll.u32 %s0, 4
      %s15 = int_to_ptr.hbm [resolvable:$true] %s14
      %s16 = sshll.u32 [#allocation2], 4
      %s17 = int_to_ptr.vmem [resolvable:$true] %s16
      %22 = dma.hbm_to_vmem [thread:$0]  %s15, 256, %s17, [#allocation3], 128, 128, 8
    $region5: #{tpu_custom_call.1} parent=1 // pred_fallthru
      _
    // Predicated region
    $region6: #{tpu_custom_call.1} parent=1 // pred_check
      _
    $region7: #{tpu_custom_call.1} parent=1 // pred_check_branch
      %24 = sbr.rel (0) target = $region9
    $region8: #{tpu_custom_call.1} parent=1 // pred_region
      %26 = vsyncadd [#allocation6], 0
      %s27 = sshll.u32 %s1, 4
      %s28 = int_to_ptr.hbm [resolvable:$true] %s27
      %s29 = sshll.u32 [#allocation5], 4
      %s30 = int_to_ptr.vmem [resolvable:$true] %s29
      %35 = dma.hbm_to_vmem [thread:$0]  %s28, 256, %s30, [#allocation6], 128, 128, 8
    $region9: #{tpu_custom_call.1} parent=1 // pred_fallthru
      _
    // Predicated region
    $region10: #{tpu_custom_call.1} parent=1 // pred_check
      _
    $region11: #{tpu_custom_call.1} parent=1 // pred_check_branch
      %37 = sbr.rel (0) target = $region13
    $region12: #{tpu_custom_call.1} parent=1 // pred_region
      %39 = dma.done [#allocation3], 256
    $region13: #{tpu_custom_call.1} parent=1 // pred_fallthru
      _
    // Predicated region
    $region14: #{tpu_custom_call.1} parent=1 // pred_check
      _
    $region15: #{tpu_custom_call.1} parent=1 // pred_check_branch
      %41 = sbr.rel (0) target = $region17
    $region16: #{tpu_custom_call.1} parent=1 // pred_region
      %43 = dma.done [#allocation6], 256
    $region17: #{tpu_custom_call.1} parent=1 // pred_fallthru
      _
    %v44 = vld [vmem:[#allocation2] sm:$0xff]
    %v45 = vld [vmem:[#allocation2 + $0x8] sm:$0xff]
    %v46 = vld [vmem:[#allocation5] sm:$0xff]
    %v47 = vld [vmem:[#allocation5 + $0x8] sm:$0xff]
    %v48 = vsub.f32 %v44, %v46
    %v49 = vsub.f32 %v45, %v47
    %v50 = vmul.f32 %v48, %v48
    %v51 = vmul.f32 %v49, %v49
    %v52 = vadd.f32 %v50, %v51
    %53 = vst [vmem:[#allocation7] sm:$0xff] %v52
    // Predicated region
    $region18: #{tpu_custom_call.1} parent=1 // pred_check
      _
    $region19: #{tpu_custom_call.1} parent=1 // pred_check_branch
      %55 = sbr.rel (0) target = $region21
    $region20: #{tpu_custom_call.1} parent=1 // pred_region
      %57 = vsyncadd [#allocation4], 0
      %s59 = sshll.u32 [#allocation7], 4
      %s60 = int_to_ptr.vmem [resolvable:$true] %s59
      %s61 = sshll.u32 %s2, 4
      %s62 = int_to_ptr.hbm [resolvable:$true] %s61
      %64 = dma.vmem_to_hbm [thread:$0]  %s60, 128, %s62, [#allocation4]
    $region21: #{tpu_custom_call.1} parent=1 // pred_fallthru
      _
    // Predicated region
    $region22: #{tpu_custom_call.1} parent=1 // pred_check
      _
    $region23: #{tpu_custom_call.1} parent=1 // pred_check_branch
      %66 = sbr.rel (0) target = $region25
    $region24: #{tpu_custom_call.1} parent=1 // pred_region
      %68 = dma.done [#allocation4], 128
    $region25: #{tpu_custom_call.1} parent=1 // pred_fallthru
      _
    %69 = vsyncpa [#allocation3], 1
    %70 = vsyncpa [#allocation6], 1
    %71 = vsyncpa [#allocation4], 1

</llo_original>
